<compile_context>
chip_gen: v5e
topology: v5e:2x2
jax: 0.10.0
libtpu: 0.0.40
codegen_flags: <defaults>
</compile_context>

<pallas_src>
import functools

import jax
import jax.numpy as jnp
from jax import lax
from jax.experimental import pallas as pl
from jax.experimental.pallas import tpu as pltpu

EPS = 1e-8
_LANES = 128
_SUBLANES = 8


def _tpu_config():
    """Generation-aware (vmem_limit_bytes, num_tensorcores)."""
    phys = 64 * 1024 * 1024
    try:
        info = pltpu.get_tpu_info()
        phys = int(getattr(info, "vmem_capacity_bytes", phys))
    except Exception:
        pass
    if phys >= 96 * 1024 * 1024:
        # v5e / v6e: 128 MiB physical VMEM, single TensorCore per chip.
        vmem_limit = 96 * 1024 * 1024
        num_tc = 1
    else:
        # v7x (64 MiB physical, 2 TensorCores) and smaller-VMEM chips.
        vmem_limit = min(48 * 1024 * 1024,
                         max(phys - 16 * 1024 * 1024, phys // 2))
        num_tc = 2
    return vmem_limit, num_tc


def _choose_tile_b(B, D, dtype_bytes, vmem_limit, num_tc):
    """Largest sublane-aligned tile that fits the whole per-step footprint."""
    # Per-row VMEM footprint:
    #   4 inputs x 2 pipeline buffers in the native dtype
    # + ~3 live f32 temporaries (2 upcast tiles + 1 product; the two cosine
    #   pairs are processed sequentially in the kernel).
    per_row = 4 * 2 * D * dtype_bytes + 3 * D * 4
    margin = 4 * 1024 * 1024  # output block, compiler scratch, slack
    tb_raw = (vmem_limit - margin) // per_row
    tb = max(_SUBLANES, (tb_raw // _SUBLANES) * _SUBLANES)

    rounded_b = ((B + _SUBLANES - 1) // _SUBLANES) * _SUBLANES
    tb = min(tb, rounded_b)

    if num_tc >= 2 and rounded_b > _SUBLANES:
        # Keep both v7x TensorCores busy: at least two grid blocks.
        half = ((pl.cdiv(B, 2) + _SUBLANES - 1) // _SUBLANES) * _SUBLANES
        tb = min(tb, half)

    return max(_SUBLANES, tb)


def _neg_cos_sim_kernel(z0_ref, p0_ref, z1_ref, p1_ref, part_ref, *,
                        batch, tile_b, eps):
    i = pl.program_id(0)
    eps_sq = jnp.float32(eps) * jnp.float32(eps)

    def cos_rows(a_ref, b_ref):
        # Load/upcast at point of use so only one pair's f32 tiles are live.
        a = a_ref[...].astype(jnp.float32)
        b = b_ref[...].astype(jnp.float32)
        dot = jnp.sum(a * b, axis=1, keepdims=True)
        aa = jnp.sum(a * a, axis=1, keepdims=True)
        bb = jnp.sum(b * b, axis=1, keepdims=True)
        # max(||a||,eps)*max(||b||,eps) == sqrt(max(aa,eps^2)*max(bb,eps^2))
        denom = jnp.maximum(aa, eps_sq) * jnp.maximum(bb, eps_sq)
        return dot * lax.rsqrt(denom)          # rsqrt -> EUP slot

    # Two pairs processed sequentially (halves peak f32 pressure).
    c = cos_rows(p0_ref, z1_ref) + cos_rows(p1_ref, z0_ref)   # (TB, 1)

    def write(val):
        part_ref[...] = jnp.broadcast_to(
            val, (1, _SUBLANES, _LANES)).astype(jnp.float32)

    if batch % tile_b == 0:
        # No ragged tail: no mask anywhere.
        write(jnp.sum(c))
    else:
        last = pl.num_programs(0) - 1

        @pl.when(i == last)
        def _():
            row = i * tile_b + lax.broadcasted_iota(jnp.int32, (tile_b, 1), 0)
            write(jnp.sum(jnp.where(row < batch, c, 0.0)))

        @pl.when(i != last)
        def _():
            write(jnp.sum(c))


def negative_cosine_similarity(x0, x1, *, eps=EPS, tile_b=None):
    """x0 = (z0, p0), x1 = (z1, p1); each tensor shaped (B, D)."""
    z0, p0 = x0
    z1, p1 = x1
    B, D = z0.shape
    dtype_bytes = jnp.dtype(z0.dtype).itemsize

    vmem_limit, num_tc = _tpu_config()
    budget_tb = _choose_tile_b(B, D, dtype_bytes, vmem_limit, num_tc)
    if tile_b is None:
        tb = budget_tb
    else:
        tb = max(_SUBLANES, ((tile_b + _SUBLANES - 1) // _SUBLANES) * _SUBLANES)
        tb = min(tb, budget_tb)   # user tile_b still respects the VMEM budget

    num_blocks = pl.cdiv(B, tb)

    cost = pl.CostEstimate(
        flops=12 * B * D,                       # 3 length-D dots per pair, 2 pairs
        transcendentals=2 * B,                  # one rsqrt per row per pair
        bytes_accessed=4 * B * D * dtype_bytes
        + num_blocks * _SUBLANES * _LANES * 4,
    )

    kernel = functools.partial(_neg_cos_sim_kernel, batch=B, tile_b=tb, eps=eps)

    partials = pl.pallas_call(
        kernel,
        out_shape=jax.ShapeDtypeStruct((num_blocks, _SUBLANES, _LANES),
                                       jnp.float32),
        grid=(num_blocks,),
        in_specs=[pl.BlockSpec((tb, D), lambda i: (i, 0)) for _ in range(4)],
        out_specs=pl.BlockSpec((1, _SUBLANES, _LANES), lambda i: (i, 0, 0)),
        compiler_params=pltpu.CompilerParams(
            dimension_semantics=("parallel",),
            vmem_limit_bytes=vmem_limit,
        ),
        cost_estimate=cost,
    )(z0, p0, z1, p1)

    total = jnp.sum(partials[:, 0, 0])          # sum of per-row cosines, both pairs
    return -0.5 * total / B


def _reference(x0, x1, eps=EPS):
    def cos(a, b):
        a = a.astype(jnp.float32)
        b = b.astype(jnp.float32)
        dot = jnp.sum(a * b, axis=1)
        na = jnp.maximum(jnp.linalg.norm(a, axis=1), eps)
        nb = jnp.maximum(jnp.linalg.norm(b, axis=1), eps)
        return dot / (na * nb)
    z0, p0 = x0
    z1, p1 = x1
    return -(jnp.mean(cos(p0, z1)) + jnp.mean(cos(p1, z0))) * 0.5


if __name__ == "__main__":
    # Case 1: small shapes consistent with the module (batch=8, hidden=32).
    key = jax.random.PRNGKey(0)
    k0, k1, k2, k3 = jax.random.split(key, 4)
    B, D = 8, 32
    z0 = jax.random.normal(k0, (B, D), dtype=jnp.float32)
    p0 = jax.random.normal(k1, (B, D), dtype=jnp.float32)
    z1 = jax.random.normal(k2, (B, D), dtype=jnp.float32)
    p1 = jax.random.normal(k3, (B, D), dtype=jnp.float32)

    loss = jax.block_until_ready(negative_cosine_similarity((z0, p0), (z1, p1)))
    ref = _reference((z0, p0), (z1, p1))
    assert jnp.allclose(loss, ref, atol=1e-5, rtol=1e-5), (loss, ref)

    # Case 2: ragged batch + multiple grid steps (exercises pl.when masking
    # and multi-block partial sums).
    B2, D2 = 20, 128
    kk = jax.random.split(jax.random.PRNGKey(1), 4)
    t = [jax.random.normal(k, (B2, D2), dtype=jnp.float32) for k in kk]
    loss2 = jax.block_until_ready(
        negative_cosine_similarity((t[0], t[1]), (t[2], t[3]), tile_b=8))
    ref2 = _reference((t[0], t[1]), (t[2], t[3]))
    assert jnp.allclose(loss2, ref2, atol=1e-5, rtol=1e-5), (loss2, ref2)

    # Case 3: bf16 inputs (exercises in-kernel upcast path).
    B3, D3 = 16, 64
    kk3 = jax.random.split(jax.random.PRNGKey(2), 4)
    u = [jax.random.normal(k, (B3, D3), dtype=jnp.bfloat16) for k in kk3]
    loss3 = jax.block_until_ready(
        negative_cosine_similarity((u[0], u[1]), (u[2], u[3])))
    ref3 = _reference((u[0], u[1]), (u[2], u[3]))
    assert jnp.allclose(loss3, ref3, atol=1e-4, rtol=1e-4), (loss3, ref3)

    print("KERNEL_OK")
</pallas_src>

<mosaic_0001>
module attributes {stable_mosaic.version = 11 : i64} {
  func.func @_neg_cos_sim_kernel(%arg0: i32, %arg1: memref<8x32xf32, #tpu.memory_space<vmem>>, %arg2: memref<8x32xf32, #tpu.memory_space<vmem>>, %arg3: memref<8x32xf32, #tpu.memory_space<vmem>>, %arg4: memref<8x32xf32, #tpu.memory_space<vmem>>, %arg5: memref<1x8x128xf32, #tpu.memory_space<vmem>>) attributes {dimension_semantics = [#tpu.dimension_semantics<parallel>], iteration_bounds = array<i64: 1>, scalar_prefetch = 0 : i64, scratch_operands = 0 : i64, tpu.core_type = #tpu.core_type<tc>, window_params = [{transform_indices = @transform_0, window_bounds = array<i64: 8, 32>}, {transform_indices = @transform_1, window_bounds = array<i64: 8, 32>}, {transform_indices = @transform_2, window_bounds = array<i64: 8, 32>}, {transform_indices = @transform_3, window_bounds = array<i64: 8, 32>}, {transform_indices = @transform_4, window_bounds = array<i64: 1, 8, 128>}]} {
    %cst = arith.constant 9.99999993E-9 : f32
    %cst_0 = arith.constant 9.99999993E-9 : f32
    %0 = arith.mulf %cst, %cst_0 : f32
    %c0 = arith.constant 0 : index
    %c0_1 = arith.constant 0 : index
    %1 = vector.load %arg2[%c0, %c0_1] : memref<8x32xf32, #tpu.memory_space<vmem>>, vector<8x32xf32>
    %c0_2 = arith.constant 0 : index
    %c0_3 = arith.constant 0 : index
    %2 = vector.load %arg3[%c0_2, %c0_3] : memref<8x32xf32, #tpu.memory_space<vmem>>, vector<8x32xf32>
    %3 = arith.mulf %1, %2 : vector<8x32xf32>
    %cst_4 = arith.constant dense<0.000000e+00> : vector<8xf32>
    %4 = vector.multi_reduction <add>, %3, %cst_4 [1] : vector<8x32xf32> to vector<8xf32>
    %5 = vector.shape_cast %4 : vector<8xf32> to vector<8x1xf32>
    %6 = arith.mulf %1, %1 : vector<8x32xf32>
    %cst_5 = arith.constant dense<0.000000e+00> : vector<8xf32>
    %7 = vector.multi_reduction <add>, %6, %cst_5 [1] : vector<8x32xf32> to vector<8xf32>
    %8 = vector.shape_cast %7 : vector<8xf32> to vector<8x1xf32>
    %9 = arith.mulf %2, %2 : vector<8x32xf32>
    %cst_6 = arith.constant dense<0.000000e+00> : vector<8xf32>
    %10 = vector.multi_reduction <add>, %9, %cst_6 [1] : vector<8x32xf32> to vector<8xf32>
    %11 = vector.shape_cast %10 : vector<8xf32> to vector<8x1xf32>
    %12 = vector.broadcast %0 : f32 to vector<8x1xf32>
    %13 = arith.maximumf %8, %12 : vector<8x1xf32>
    %14 = vector.broadcast %0 : f32 to vector<8x1xf32>
    %15 = arith.maximumf %11, %14 : vector<8x1xf32>
    %16 = arith.mulf %13, %15 : vector<8x1xf32>
    %17 = math.rsqrt %16 : vector<8x1xf32>
    %18 = arith.mulf %5, %17 : vector<8x1xf32>
    %c0_7 = arith.constant 0 : index
    %c0_8 = arith.constant 0 : index
    %19 = vector.load %arg4[%c0_7, %c0_8] : memref<8x32xf32, #tpu.memory_space<vmem>>, vector<8x32xf32>
    %c0_9 = arith.constant 0 : index
    %c0_10 = arith.constant 0 : index
    %20 = vector.load %arg1[%c0_9, %c0_10] : memref<8x32xf32, #tpu.memory_space<vmem>>, vector<8x32xf32>
    %21 = arith.mulf %19, %20 : vector<8x32xf32>
    %cst_11 = arith.constant dense<0.000000e+00> : vector<8xf32>
    %22 = vector.multi_reduction <add>, %21, %cst_11 [1] : vector<8x32xf32> to vector<8xf32>
    %23 = vector.shape_cast %22 : vector<8xf32> to vector<8x1xf32>
    %24 = arith.mulf %19, %19 : vector<8x32xf32>
    %cst_12 = arith.constant dense<0.000000e+00> : vector<8xf32>
    %25 = vector.multi_reduction <add>, %24, %cst_12 [1] : vector<8x32xf32> to vector<8xf32>
    %26 = vector.shape_cast %25 : vector<8xf32> to vector<8x1xf32>
    %27 = arith.mulf %20, %20 : vector<8x32xf32>
    %cst_13 = arith.constant dense<0.000000e+00> : vector<8xf32>
    %28 = vector.multi_reduction <add>, %27, %cst_13 [1] : vector<8x32xf32> to vector<8xf32>
    %29 = vector.shape_cast %28 : vector<8xf32> to vector<8x1xf32>
    %30 = vector.broadcast %0 : f32 to vector<8x1xf32>
    %31 = arith.maximumf %26, %30 : vector<8x1xf32>
    %32 = vector.broadcast %0 : f32 to vector<8x1xf32>
    %33 = arith.maximumf %29, %32 : vector<8x1xf32>
    %34 = arith.mulf %31, %33 : vector<8x1xf32>
    %35 = math.rsqrt %34 : vector<8x1xf32>
    %36 = arith.mulf %23, %35 : vector<8x1xf32>
    %37 = arith.addf %18, %36 : vector<8x1xf32>
    %38 = vector.shape_cast %37 : vector<8x1xf32> to vector<1x8x1xf32>
    %cst_14 = arith.constant dense<0.000000e+00> : vector<1xf32>
    %39 = vector.multi_reduction <add>, %38, %cst_14 [1, 2] : vector<1x8x1xf32> to vector<1xf32>
    %40 = vector.shape_cast %39 : vector<1xf32> to vector<1x1x1xf32>
    %41 = vector.extract %40[0, 0, 0] : f32 from vector<1x1x1xf32>
    %42 = vector.broadcast %41 : f32 to vector<1x8x128xf32>
    %c0_15 = arith.constant 0 : index
    %c0_16 = arith.constant 0 : index
    %c0_17 = arith.constant 0 : index
    %43 = vector.load %arg5[%c0_15, %c0_16, %c0_17] : memref<1x8x128xf32, #tpu.memory_space<vmem>>, vector<1x8x128xf32>
    tpu.vector_store %arg5[%c0_15, %c0_16, %c0_17], %42 {strides = array<i32>} : memref<1x8x128xf32, #tpu.memory_space<vmem>>, vector<1x8x128xf32>,
    return
  }
  func.func @transform_0(%arg0: i32) -> (i32, i32) {
    %c0_i32 = arith.constant 0 : i32
    %c0_i32_0 = arith.constant 0 : i32
    return %arg0, %c0_i32 : i32, i32
  }
  func.func @transform_1(%arg0: i32) -> (i32, i32) {
    %c0_i32 = arith.constant 0 : i32
    %c0_i32_0 = arith.constant 0 : i32
    return %arg0, %c0_i32 : i32, i32
  }
  func.func @transform_2(%arg0: i32) -> (i32, i32) {
    %c0_i32 = arith.constant 0 : i32
    %c0_i32_0 = arith.constant 0 : i32
    return %arg0, %c0_i32 : i32, i32
  }
  func.func @transform_3(%arg0: i32) -> (i32, i32) {
    %c0_i32 = arith.constant 0 : i32
    %c0_i32_0 = arith.constant 0 : i32
    return %arg0, %c0_i32 : i32, i32
  }
  func.func @transform_4(%arg0: i32) -> (i32, i32, i32) {
    %c0_i32 = arith.constant 0 : i32
    %c0_i32_0 = arith.constant 0 : i32
    %c0_i32_1 = arith.constant 0 : i32
    return %arg0, %c0_i32, %c0_i32_0 : i32, i32, i32
  }
}

</mosaic_0001>

<llo_original>
// kernel: tpu_custom_call.1
$region0: #{tpu_custom_call.1}
  #allocation0 [shape = 'u32[]', space=smem, size = 0x4, offset = 0x4, fixed_abs, tag = 'smem constant byte address 0x4 - core index']
  #allocation1 [shape = 'u32[72,128]{1,0:T(1,128)}', space=vmem, size = 0x9000, scoped, tag = 'internal scratch']
  %s0 = inlined_call_operand.hbm [shape: f32[8,32], index: 0, kind: input, shape index: {}]
  %s1 = inlined_call_operand.hbm [shape: f32[8,32], index: 1, kind: input, shape index: {}]
  %s2 = inlined_call_operand.hbm [shape: f32[8,32], index: 2, kind: input, shape index: {}]
  %s3 = inlined_call_operand.hbm [shape: f32[8,32], index: 3, kind: input, shape index: {}]
  %s4 = inlined_call_operand.hbm [shape: f32[1,8,128], index: 4, kind: output, shape index: {}]
  %s5 = sld [smem:[#allocation0]]
  $region42: #{tpu_custom_call.1} parent=0
    _
  %s7 = ssub.s32 1, %s5
  %s8 = scalar_select 0, %s7, %s5
  $region1: #{tpu_custom_call.1} parent=0
    #allocation2 [shape = 'u8[4096]{0}', space=vmem, size = 0x1000, scoped, tag = 'input window, operand 0, single buffered']
    #allocation3 [shape = 's32[1]{0}', space=sflag, size = 0x4, scoped, tag = 'scoped memory for tpu_custom_call.1']
    #allocation4 [shape = 's32[1]{0}', space=sflag, size = 0x4, scoped, tag = 'scoped memory for tpu_custom_call.1']
    #allocation5 [shape = 'u8[4096]{0}', space=vmem, size = 0x1000, scoped, tag = 'input window, operand 1, single buffered']
    #allocation6 [shape = 's32[1]{0}', space=sflag, size = 0x4, scoped, tag = 'scoped memory for tpu_custom_call.1']
    #allocation7 [shape = 'u8[4096]{0}', space=vmem, size = 0x1000, scoped, tag = 'input window, operand 2, single buffered']
    #allocation8 [shape = 'u8[4096]{0}', space=vmem, size = 0x1000, scoped, tag = 'input window, operand 3, single buffered']
    #allocation9 [shape = 's32[1]{0}', space=sflag, size = 0x4, scoped, tag = 'scoped memory for tpu_custom_call.1']
    #allocation10 [shape = 'u8[4096]{0}', space=vmem, size = 0x1000, scoped, tag = 'output window, operand 0, single buffered']
    %9 = vsyncpa [#allocation3], 0
    %10 = vsyncpa [#allocation6], 0
    %11 = vsyncpa [#allocation9], 0
    %12 = vsyncpa [#allocation4], 0
    // Predicated region
    $region2: #{tpu_custom_call.1} parent=1 // pred_check
      _
    $region3: #{tpu_custom_call.1} parent=1 // pred_check_branch
      %14 = sbr.rel (0) target = $region5
    $region4: #{tpu_custom_call.1} parent=1 // pred_region
      %16 = vsyncadd [#allocation3], 0
      %s18 = sshll.u32 %s0, 4
      %s19 = int_to_ptr.hbm [resolvable:$true] %s18
      %s20 = sshll.u32 [#allocation2], 4
      %s21 = int_to_ptr.vmem [resolvable:$true] %s20
      %23 = dma.hbm_to_vmem [thread:$0]  %s19, 128, %s21, [#allocation3]
    $region5: #{tpu_custom_call.1} parent=1 // pred_fallthru
      _
    // Predicated region
    $region6: #{tpu_custom_call.1} parent=1 // pred_check
      _
    $region7: #{tpu_custom_call.1} parent=1 // pred_check_branch
      %25 = sbr.rel (0) target = $region9
    $region8: #{tpu_custom_call.1} parent=1 // pred_region
      %27 = vsyncadd [#allocation6], 0
      %s29 = sshll.u32 %s1, 4
      %s30 = int_to_ptr.hbm [resolvable:$true] %s29
      %s31 = sshll.u32 [#allocation5], 4
      %s32 = int_to_ptr.vmem [resolvable:$true] %s31
      %34 = dma.hbm_to_vmem [thread:$0]  %s30, 128, %s32, [#allocation6]
    $region9: #{tpu_custom_call.1} parent=1 // pred_fallthru
      _
    // Predicated region
    $region10: #{tpu_custom_call.1} parent=1 // pred_check
      _
    $region11: #{tpu_custom_call.1} parent=1 // pred_check_branch
      %36 = sbr.rel (0) target = $region13
    $region12: #{tpu_custom_call.1} parent=1 // pred_region
      %38 = vsyncadd [#allocation6], 0
      %s40 = sshll.u32 %s2, 4
      %s41 = int_to_ptr.hbm [resolvable:$true] %s40
      %s42 = sshll.u32 [#allocation7], 4
      %s43 = int_to_ptr.vmem [resolvable:$true] %s42
      %45 = dma.hbm_to_vmem [thread:$0]  %s41, 128, %s43, [#allocation6]
    $region13: #{tpu_custom_call.1} parent=1 // pred_fallthru
      _
    // Predicated region
    $region14: #{tpu_custom_call.1} parent=1 // pred_check
      _
    $region15: #{tpu_custom_call.1} parent=1 // pred_check_branch
      %47 = sbr.rel (0) target = $region17
    $region16: #{tpu_custom_call.1} parent=1 // pred_region
      %49 = vsyncadd [#allocation9], 0
      %s51 = sshll.u32 %s3, 4
      %s52 = int_to_ptr.hbm [resolvable:$true] %s51
      %s53 = sshll.u32 [#allocation8], 4
      %s54 = int_to_ptr.vmem [resolvable:$true] %s53
      %56 = dma.hbm_to_vmem [thread:$0]  %s52, 128, %s54, [#allocation9]
    $region17: #{tpu_custom_call.1} parent=1 // pred_fallthru
      _
    // Predicated region
    $region18: #{tpu_custom_call.1} parent=1 // pred_check
      _
    $region19: #{tpu_custom_call.1} parent=1 // pred_check_branch
      %58 = sbr.rel (0) target = $region21
    $region20: #{tpu_custom_call.1} parent=1 // pred_region
      %60 = dma.done [#allocation3], 128
    $region21: #{tpu_custom_call.1} parent=1 // pred_fallthru
      _
    // Predicated region
    $region22: #{tpu_custom_call.1} parent=1 // pred_check
      _
    $region23: #{tpu_custom_call.1} parent=1 // pred_check_branch
      %62 = sbr.rel (0) target = $region25
    $region24: #{tpu_custom_call.1} parent=1 // pred_region
      %64 = dma.done [#allocation6], 128
    $region25: #{tpu_custom_call.1} parent=1 // pred_fallthru
      _
    // Predicated region
    $region26: #{tpu_custom_call.1} parent=1 // pred_check
      _
    $region27: #{tpu_custom_call.1} parent=1 // pred_check_branch
      %66 = sbr.rel (0) target = $region29
    $region28: #{tpu_custom_call.1} parent=1 // pred_region
      %68 = dma.done [#allocation6], 128
    $region29: #{tpu_custom_call.1} parent=1 // pred_fallthru
      _
    // Predicated region
    $region30: #{tpu_custom_call.1} parent=1 // pred_check
      _
    $region31: #{tpu_custom_call.1} parent=1 // pred_check_branch
      %70 = sbr.rel (0) target = $region33
    $region32: #{tpu_custom_call.1} parent=1 // pred_region
      %72 = dma.done [#allocation9], 128
    $region33: #{tpu_custom_call.1} parent=1 // pred_fallthru
      _
    %v73 = vld [vmem:[#allocation5] sm:$0xff]
    %v74 = vld [vmem:[#allocation7] sm:$0xff]
    %v75 = vmul.f32 %v73, %v74
    %vm76 = vcmask 261120
    %v77 = vsel %vm76, %v75, 0.0
    %78 = vadd.xlane.f32.xlu0 %v77
    %v79 = vpop.xlane.xlu0 %78
    %v80 = vmul.f32 %v73, %v73
    %v81 = vsel %vm76, %v80, 0.0
    %82 = vadd.xlane.f32.xlu0 %v81
    %v83 = vpop.xlane.xlu0 %82
    %v84 = vmul.f32 %v74, %v74
    %v85 = vsel %vm76, %v84, 0.0
    %86 = vadd.xlane.f32.xlu0 %v85
    %v87 = vpop.xlane.xlu0 %86
    %v88 = vmax.f32 %v83, 1e-16
    %v89 = vmax.f32 %v87, 1e-16
    %v90 = vmul.f32 %v88, %v89
    %v91 = vrsqrt.pop %v90
    %v92 = vmul.f32 %v91, %v90
    %v93 = vmul.f32 %v92, %v91
    %v94 = vmul.f32 0.5, %v93
    %v95 = vsub.f32 1.5, %v94
    %v96 = vmul.f32 %v91, %v95
    %vm97 = vweird.f32 %v90
    %vm98 = vweird.f32 %v91
    %vm99 = vmor %vm97, %vm98
    %v100 = vsel %vm99, %v91, %v96
    %v101 = vmul.f32 %v79, %v100
    %v102 = vld [vmem:[#allocation8] sm:$0xff]
    %v103 = vld [vmem:[#allocation2] sm:$0xff]
    %v104 = vmul.f32 %v102, %v103
    %v105 = vsel %vm76, %v104, 0.0
    %106 = vadd.xlane.f32.xlu0 %v105
    %v107 = vpop.xlane.xlu0 %106
    %v108 = vmul.f32 %v102, %v102
    %v109 = vsel %vm76, %v108, 0.0
    %110 = vadd.xlane.f32.xlu0 %v109
    %v111 = vpop.xlane.xlu0 %110
    %v112 = vmul.f32 %v103, %v103
    %v113 = vsel %vm76, %v112, 0.0
    %114 = vadd.xlane.f32.xlu0 %v113
    %v115 = vpop.xlane.xlu0 %114
    %v116 = vmax.f32 %v111, 1e-16
    %v117 = vmax.f32 %v115, 1e-16
    %v118 = vmul.f32 %v116, %v117
    %v119 = vrsqrt.pop %v118
    %v120 = vmul.f32 %v119, %v118
    %v121 = vmul.f32 %v120, %v119
    %v122 = vmul.f32 0.5, %v121
    %v123 = vsub.f32 1.5, %v122
    %v124 = vmul.f32 %v119, %v123
    %vm125 = vweird.f32 %v118
    %vm126 = vweird.f32 %v119
    %vm127 = vmor %vm125, %vm126
    %v128 = vsel %vm127, %v119, %v124
    %v129 = vmul.f32 %v107, %v128
    %v130 = vadd.f32 %v101, %v129
    %vm131 = vcmask 7168
    %v132 = vsel %vm131, %v130, 0.0
    %133 = vadd.xlane.f32.xlu0 %v132
    %v134 = vpop.xlane.xlu0 %133
    %v135 = vrot.slane %v134, 4
    %v136 = vadd.f32 %v134, %v135
    %v137 = vrot.slane %v136, 2
    %v138 = vadd.f32 %v136, %v137
    %v139 = vrot.slane %v138, 1
    %v140 = vadd.f32 %v138, %v139
    %s141 = vtos %v140
    %v142 = vstv %s141
    %143 = vst [vmem:[#allocation10] sm:$0xff] %v142
    // Predicated region
    $region34: #{tpu_custom_call.1} parent=1 // pred_check
      _
    $region35: #{tpu_custom_call.1} parent=1 // pred_check_branch
      %145 = sbr.rel (0) target = $region37
    $region36: #{tpu_custom_call.1} parent=1 // pred_region
      %147 = vsyncadd [#allocation4], 0
      %s149 = sshll.u32 [#allocation10], 4
      %s150 = int_to_ptr.vmem [resolvable:$true] %s149
      %s151 = sshll.u32 %s4, 4
      %s152 = int_to_ptr.hbm [resolvable:$true] %s151
      %154 = dma.vmem_to_hbm [thread:$0]  %s150, 128, %s152, [#allocation4]
    $region37: #{tpu_custom_call.1} parent=1 // pred_fallthru
      _
    // Predicated region
    $region38: #{tpu_custom_call.1} parent=1 // pred_check
      _
    $region39: #{tpu_custom_call.1} parent=1 // pred_check_branch
      %156 = sbr.rel (0) target = $region41
    $region40: #{tpu_custom_call.1} parent=1 // pred_region
      %158 = dma.done [#allocation4], 128
    $region41: #{tpu_custom_call.1} parent=1 // pred_fallthru
      _
    %159 = vsyncpa [#allocation3], 1
    %160 = vsyncpa [#allocation6], 1
    %161 = vsyncpa [#allocation9], 1
    %162 = vsyncpa [#allocation4], 1

</llo_original>
